<compile_context>
chip_gen: v7x
topology: tpu7x:2x2x1
jax: 0.10.0
libtpu: 0.0.40
codegen_flags: <defaults>
</compile_context>

<pallas_src>
import functools

import jax
import jax.numpy as jnp
import numpy as np
from jax import lax
from jax.experimental import pallas as pl
from jax.experimental.pallas import tpu as pltpu

EPS = 1e-5  # nn.InstanceNorm2d default eps


# --------------------------------------------------------------------------- #
# Host-side constant folding (cached; fold once per layer in a real model).    #
# --------------------------------------------------------------------------- #
def _reflect_idx(i, n):
    if i < 0:
        return -i
    if i >= n:
        return 2 * n - 2 - i
    return i


@functools.lru_cache(maxsize=None)
def _reflect_shift_mats(W, kw=3):
    """0/1 matrices folding the ReflectionPad2d(1) x-shift; cached per (W, kw)."""
    sx = np.zeros((kw, W, W), np.float32)
    for kx in range(kw):
        for x in range(W):
            sx[kx, x, _reflect_idx(x + kx - 1, W)] = 1.0
    return sx


def _fold_conv_weights(w_oihw, W, param_dtype):
    """Fold ReflectionPad2d(1) + 3x3-conv x-shift + channel mixing into a single
    (3*W*Cin, W*Cout) lane-mixing matrix for the lane-dense (rows, W*C) layout.
    The three ky taps are stacked along K so the whole conv is ONE MXU matmul
    against the lane-concatenated [row_up, row, row_dn] operand."""
    cout, cin, kh, kw = w_oihw.shape
    sx = jnp.asarray(_reflect_shift_mats(W, kw))
    # a[ky, x', ci, x, co] = sum_kx sx[kx, x, x'] * w[co, ci, ky, kx]
    a = jnp.einsum("kxp,oiyk->ypixo", sx, w_oihw.astype(jnp.float32))
    return a.reshape(kh * W * cin, W * cout).astype(param_dtype)


def _choose_batch_block(N, H, target_rows=256):
    """Samples per grid step: aim for ~128-256 matmul rows, require NB | N, and
    keep >= 2 grid steps when N >= 2 so both v7x TensorCores get work."""
    nb = max(1, min(N, max(1, target_rows // H)))
    while N % nb:
        nb -= 1
    while nb > 1 and N // nb < 2:
        nb -= 1
        while N % nb:
            nb -= 1
    return nb


# --------------------------------------------------------------------------- #
# Kernel                                                                       #
# --------------------------------------------------------------------------- #
def _make_kernel(NB, H, W, C):
    WC = W * C
    M = NB * H

    def kernel(x_ref, a1_ref, a2_ref, o_ref):
        x = x_ref[...].reshape(M, WC).astype(jnp.float32)  # (NB,H,WC)->(M,WC), free

        # Per-sample row index for the reflected boundary rows.  The circular
        # wrap of the rolls only ever lands on rows that the where() overrides.
        row = lax.broadcasted_iota(jnp.int32, (M, 1), 0)
        rmod = row % H
        is_top = rmod == 0          # first row of a sample: up-neighbor is row 1
        is_bot = rmod == (H - 1)    # last row of a sample:  dn-neighbor is row H-2

        def conv3x3(v, a_ref):
            # Reflect-padded 3x3 conv as ONE K=3*WC matmul.  Row shifts go to the
            # XLU (sublane roll) + VPU (boundary select); no permutation matmuls.
            vm = pltpu.roll(v, shift=1, axis=0)        # vm[y] = v[y-1] (circular)
            vp = pltpu.roll(v, shift=M - 1, axis=0)    # vp[y] = v[y+1] (circular)
            up = jnp.where(is_top, vp, vm)             # reflection at y = 0
            dn = jnp.where(is_bot, vm, vp)             # reflection at y = H-1
            wdt = a_ref.dtype
            xk = jnp.concatenate(                       # 128-aligned lane concat
                [up.astype(wdt), v.astype(wdt), dn.astype(wdt)], axis=-1)
            return jnp.dot(xk, a_ref[...], preferred_element_type=jnp.float32)

        def instance_norm(v):
            # Per-sample per-channel stats, fully lane-dense, no matmuls:
            # sublane row-sum + log2(W) lane roll-tree (stride C) reduces over x
            # and leaves every lane holding its channel's spatial sum.
            v3 = v.reshape(NB, H, WC)
            s1 = jnp.sum(v3, axis=1)              # (NB, WC)
            s2 = jnp.sum(v3 * v3, axis=1)         # (NB, WC)  one-pass variance
            k = C
            while k < WC:                          # W is a power of two
                s1 = s1 + pltpu.roll(s1, shift=k, axis=1)
                s2 = s2 + pltpu.roll(s2, shift=k, axis=1)
                k *= 2
            inv_hw = 1.0 / float(H * W)
            mean = s1 * inv_hw
            var = s2 * inv_hw - mean * mean
            scale = lax.rsqrt(var + EPS)           # EUP
            return ((v3 - mean[:, None, :]) * scale[:, None, :]).reshape(M, WC)

        # Conv bias intentionally omitted: InstanceNorm2d(affine=False) subtracts
        # the per-channel mean right after each conv, cancelling it exactly.
        y = jnp.maximum(instance_norm(conv3x3(x, a1_ref)), 0.0)       # ReLU
        # TODO(synk): nn.Dropout(0.5) (use_dropout=True, training mode) omitted;
        # it is identity in eval and absent in the use_dropout=False config.
        z = instance_norm(conv3x3(y, a2_ref))
        o_ref[...] = (x + z).reshape(NB, H, WC).astype(o_ref.dtype)

    return kernel


# --------------------------------------------------------------------------- #
# Wrapper                                                                      #
# --------------------------------------------------------------------------- #
def resnet_block(x_nchw, w1, b1, w2, b2, *, param_dtype=jnp.bfloat16):
    """x_nchw: (N, C, H, W); w*: (C, C, 3, 3); b*: (C,).

    b1/b2 are accepted for interface parity with the PyTorch module but are NOT
    used: under InstanceNorm2d(affine=False) a per-channel conv bias only shifts
    the per-channel mean and is removed exactly by the normalization.
    """
    del b1, b2
    N, C, H, W = x_nchw.shape
    WC = W * C
    assert WC % 128 == 0, "pad channels so W*C is a multiple of 128 (lane-dense)"
    assert W & (W - 1) == 0, "lane roll-tree reduction assumes W is a power of two"
    assert H % 8 == 0 and H >= 2 and W >= 2
    # TODO(synk): for large WC switch to an im2col / H-tiled path and single-buffer
    # the constant-index weight specs (folded weights grow as W x; v7x VMEM is 64 MiB).

    NB = _choose_batch_block(N, H)
    steps = N // NB
    M = NB * H

    # NCHW -> NHWC -> lane-dense (N, H, W*C).  In an NHWC pipeline the transpose
    # disappears and the reshape is free metadata.
    x_l = jnp.transpose(x_nchw, (0, 2, 3, 1)).reshape(N, H, WC)

    # Fold conv weights (once per layer in a real model; constant-folds under jit).
    a1 = _fold_conv_weights(w1, W, param_dtype)      # (3*WC, WC)
    a2 = _fold_conv_weights(w2, W, param_dtype)      # (3*WC, WC)

    wbytes = 2 * 3 * WC * WC * np.dtype(param_dtype).itemsize
    cost = pl.CostEstimate(
        flops=steps * 2 * (2 * M * (3 * WC) * WC),   # two fused-K conv matmuls / step
        transcendentals=steps * 2 * NB * WC,         # rsqrt lanes per norm
        bytes_accessed=4 * 2 * N * H * WC + wbytes,
    )

    out = pl.pallas_call(
        _make_kernel(NB, H, W, C),
        out_shape=jax.ShapeDtypeStruct((N, H, WC), x_l.dtype),
        grid_spec=pltpu.PrefetchScalarGridSpec(
            num_scalar_prefetch=0,
            grid=(steps,),
            in_specs=[
                pl.BlockSpec((NB, H, WC), lambda n: (n, 0, 0)),   # activations
                pl.BlockSpec((3 * WC, WC), lambda n: (0, 0)),     # conv1 folded weights
                pl.BlockSpec((3 * WC, WC), lambda n: (0, 0)),     # conv2 folded weights
            ],
            out_specs=pl.BlockSpec((NB, H, WC), lambda n: (n, 0, 0)),
        ),
        compiler_params=pltpu.CompilerParams(
            dimension_semantics=("parallel",),
            vmem_limit_bytes=32 * 1024 * 1024,
        ),
        cost_estimate=cost,
    )(x_l, a1, a2)

    return jnp.transpose(out.reshape(N, H, W, C), (0, 3, 1, 2))   # back to NCHW


# ----------------------------- pure-JAX reference ----------------------------- #
def _ref_resnet_block(x, w1, b1, w2, b2):
    def conv(xx, w, b):
        xp = jnp.pad(xx, ((0, 0), (0, 0), (1, 1), (1, 1)), mode="reflect")
        y = lax.conv_general_dilated(
            xp, w, window_strides=(1, 1), padding="VALID",
            dimension_numbers=("NCHW", "OIHW", "NCHW"))
        return y + b[None, :, None, None]

    def inorm(xx):
        mean = xx.mean(axis=(2, 3), keepdims=True)
        var = ((xx - mean) ** 2).mean(axis=(2, 3), keepdims=True)
        return (xx - mean) / jnp.sqrt(var + EPS)

    y = jnp.maximum(inorm(conv(x, w1, b1)), 0.0)
    z = inorm(conv(y, w2, b2))
    return x + z


if __name__ == "__main__":
    # dim = 8 -> W*C = 128 lanes (lane-dense); N = 4 -> NB = 2 samples/step, 2
    # "parallel" grid steps (both v7x TensorCores busy), M = 32 matmul rows.
    N, C, H, W = 4, 8, 16, 16
    key = jax.random.PRNGKey(0)
    kx_, kw1, kb1, kw2, kb2 = jax.random.split(key, 5)

    x = jax.random.normal(kx_, (N, C, H, W), dtype=jnp.float32)
    w1 = jax.random.normal(kw1, (C, C, 3, 3), dtype=jnp.float32) * 0.1
    b1 = jax.random.normal(kb1, (C,), dtype=jnp.float32) * 0.1
    w2 = jax.random.normal(kw2, (C, C, 3, 3), dtype=jnp.float32) * 0.1
    b2 = jax.random.normal(kb2, (C,), dtype=jnp.float32) * 0.1

    ref = jax.block_until_ready(_ref_resnet_block(x, w1, b1, w2, b2))

    # 1) Structural exactness in f32 against the PyTorch-semantics reference.
    block_f32 = jax.jit(functools.partial(resnet_block, param_dtype=jnp.float32))
    out_f32 = jax.block_until_ready(block_f32(x, w1, b1, w2, b2))
    assert out_f32.shape == (N, C, H, W)
    assert jnp.allclose(out_f32, ref, atol=1e-4, rtol=1e-4), "f32 kernel mismatch"

    # 2) Default bf16-weight/LHS fast path (f32 accumulation): bf16-level accuracy.
    block_bf16 = jax.jit(functools.partial(resnet_block, param_dtype=jnp.bfloat16))
    out_bf16 = jax.block_until_ready(block_bf16(x, w1, b1, w2, b2))
    rel = float(jnp.sqrt(jnp.sum((out_bf16 - ref) ** 2) / jnp.sum(ref ** 2)))
    assert rel < 2e-2, f"bf16 kernel rel-L2 error too high: {rel}"

    print("KERNEL_OK")
</pallas_src>

<mosaic_0001>
module attributes {stable_mosaic.version = 11 : i64} {
  func.func @kernel(%arg0: i32, %arg1: memref<2x16x128xf32, #tpu.memory_space<vmem>>, %arg2: memref<384x128xf32, #tpu.memory_space<vmem>>, %arg3: memref<384x128xf32, #tpu.memory_space<vmem>>, %arg4: memref<2x16x128xf32, #tpu.memory_space<vmem>>) attributes {dimension_semantics = [#tpu.dimension_semantics<parallel>], iteration_bounds = array<i64: 2>, scalar_prefetch = 0 : i64, scratch_operands = 0 : i64, tpu.core_type = #tpu.core_type<tc>, window_params = [{transform_indices = @transform_0, window_bounds = array<i64: 2, 16, 128>}, {pipeline_mode = #tpu.pipeline_mode<synchronous>, transform_indices = @transform_1, window_bounds = array<i64: 384, 128>}, {pipeline_mode = #tpu.pipeline_mode<synchronous>, transform_indices = @transform_2, window_bounds = array<i64: 384, 128>}, {transform_indices = @transform_3, window_bounds = array<i64: 2, 16, 128>}]} {
    %c0 = arith.constant 0 : index
    %c0_0 = arith.constant 0 : index
    %c0_1 = arith.constant 0 : index
    %0 = vector.load %arg1[%c0, %c0_0, %c0_1] : memref<2x16x128xf32, #tpu.memory_space<vmem>>, vector<2x16x128xf32>
    %1 = vector.shape_cast %0 : vector<2x16x128xf32> to vector<32x128xf32>
    %2 = tpu.iota {dimensions = array<i32: 0>} : vector<32x1xi32>
    %c16_i32 = arith.constant 16 : i32
    %c0_i32 = arith.constant 0 : i32
    %3 = arith.cmpi eq, %c16_i32, %c0_i32 : i32
    %c1_i32 = arith.constant 1 : i32
    %4 = arith.select %3, %c1_i32, %c16_i32 : i32
    %5 = vector.broadcast %4 : i32 to vector<32x1xi32>
    %6 = arith.remsi %2, %5 : vector<32x1xi32>
    %c0_i32_2 = arith.constant 0 : i32
    %7 = vector.broadcast %c0_i32_2 : i32 to vector<32x1xi32>
    %8 = arith.cmpi ne, %6, %7 : vector<32x1xi32>
    %c0_i32_3 = arith.constant 0 : i32
    %9 = vector.broadcast %c0_i32_3 : i32 to vector<32x1xi32>
    %10 = arith.cmpi slt, %6, %9 : vector<32x1xi32>
    %c0_i32_4 = arith.constant 0 : i32
    %11 = arith.cmpi slt, %4, %c0_i32_4 : i32
    %12 = vector.broadcast %11 : i1 to vector<32x1xi1>
    %13 = vector.broadcast %12 : vector<32x1xi1> to vector<32x1xi1>
    %14 = arith.xori %10, %13 : vector<32x1xi1>
    %15 = arith.andi %14, %8 : vector<32x1xi1>
    %16 = vector.broadcast %4 : i32 to vector<32x1xi32>
    %17 = arith.addi %6, %16 : vector<32x1xi32>
    %18 = arith.select %15, %17, %6 : vector<32x1xi1>, vector<32x1xi32>
    %c0_i32_5 = arith.constant 0 : i32
    %19 = vector.broadcast %c0_i32_5 : i32 to vector<32x1xi32>
    %20 = arith.cmpi eq, %18, %19 : vector<32x1xi32>
    %c15_i32 = arith.constant 15 : i32
    %21 = vector.broadcast %c15_i32 : i32 to vector<32x1xi32>
    %22 = arith.cmpi eq, %18, %21 : vector<32x1xi32>
    %c1_i32_6 = arith.constant 1 : i32
    %23 = tpu.dynamic_rotate %1 by %c1_i32_6 dim 0 : vector<32x128xf32>, i32 -> vector<32x128xf32>
    %c31_i32 = arith.constant 31 : i32
    %24 = tpu.dynamic_rotate %1 by %c31_i32 dim 0 : vector<32x128xf32>, i32 -> vector<32x128xf32>
    %25 = vector.shape_cast %20 : vector<32x1xi1> to vector<32x1xi1>
    %26 = vector.broadcast %25 : vector<32x1xi1> to vector<32x128xi1>
    %27 = arith.select %26, %24, %23 : vector<32x128xi1>, vector<32x128xf32>
    %28 = vector.shape_cast %22 : vector<32x1xi1> to vector<32x1xi1>
    %29 = vector.broadcast %28 : vector<32x1xi1> to vector<32x128xi1>
    %30 = arith.select %29, %23, %24 : vector<32x128xi1>, vector<32x128xf32>
    %31 = tpu.concatenate %27, %1, %30 in 1 : vector<32x128xf32>, vector<32x128xf32>, vector<32x128xf32> -> vector<32x384xf32>
    %c0_7 = arith.constant 0 : index
    %c0_8 = arith.constant 0 : index
    %32 = vector.load %arg2[%c0_7, %c0_8] : memref<384x128xf32, #tpu.memory_space<vmem>>, vector<384x128xf32>
    %cst = arith.constant dense<0.000000e+00> : vector<32x128xf32>
    %33 = tpu.matmul %31, %32, %cst {dimension_numbers = #tpu.dot_dimension_numbers<[1], [0], [0], [1], [0, 0, 1, 1], [], []>} : vector<32x384xf32>, vector<384x128xf32>, vector<32x128xf32> -> vector<32x128xf32>
    %34 = vector.shape_cast %33 : vector<32x128xf32> to vector<2x16x128xf32>
    %cst_9 = arith.constant dense<0.000000e+00> : vector<2x128xf32>
    %35 = vector.multi_reduction <add>, %34, %cst_9 [1] : vector<2x16x128xf32> to vector<2x128xf32>
    %36 = arith.mulf %34, %34 : vector<2x16x128xf32>
    %cst_10 = arith.constant dense<0.000000e+00> : vector<2x128xf32>
    %37 = vector.multi_reduction <add>, %36, %cst_10 [1] : vector<2x16x128xf32> to vector<2x128xf32>
    %c8_i32 = arith.constant 8 : i32
    %38 = tpu.dynamic_rotate %35 by %c8_i32 dim 1 : vector<2x128xf32>, i32 -> vector<2x128xf32>
    %39 = arith.addf %35, %38 : vector<2x128xf32>
    %c8_i32_11 = arith.constant 8 : i32
    %40 = tpu.dynamic_rotate %37 by %c8_i32_11 dim 1 : vector<2x128xf32>, i32 -> vector<2x128xf32>
    %41 = arith.addf %37, %40 : vector<2x128xf32>
    %c16_i32_12 = arith.constant 16 : i32
    %42 = tpu.dynamic_rotate %39 by %c16_i32_12 dim 1 : vector<2x128xf32>, i32 -> vector<2x128xf32>
    %43 = arith.addf %39, %42 : vector<2x128xf32>
    %c16_i32_13 = arith.constant 16 : i32
    %44 = tpu.dynamic_rotate %41 by %c16_i32_13 dim 1 : vector<2x128xf32>, i32 -> vector<2x128xf32>
    %45 = arith.addf %41, %44 : vector<2x128xf32>
    %c32_i32 = arith.constant 32 : i32
    %46 = tpu.dynamic_rotate %43 by %c32_i32 dim 1 : vector<2x128xf32>, i32 -> vector<2x128xf32>
    %47 = arith.addf %43, %46 : vector<2x128xf32>
    %c32_i32_14 = arith.constant 32 : i32
    %48 = tpu.dynamic_rotate %45 by %c32_i32_14 dim 1 : vector<2x128xf32>, i32 -> vector<2x128xf32>
    %49 = arith.addf %45, %48 : vector<2x128xf32>
    %c64_i32 = arith.constant 64 : i32
    %50 = tpu.dynamic_rotate %47 by %c64_i32 dim 1 : vector<2x128xf32>, i32 -> vector<2x128xf32>
    %51 = arith.addf %47, %50 : vector<2x128xf32>
    %c64_i32_15 = arith.constant 64 : i32
    %52 = tpu.dynamic_rotate %49 by %c64_i32_15 dim 1 : vector<2x128xf32>, i32 -> vector<2x128xf32>
    %53 = arith.addf %49, %52 : vector<2x128xf32>
    %cst_16 = arith.constant 3.906250e-03 : f32
    %54 = vector.broadcast %cst_16 : f32 to vector<2x128xf32>
    %55 = arith.mulf %51, %54 : vector<2x128xf32>
    %cst_17 = arith.constant 3.906250e-03 : f32
    %56 = vector.broadcast %cst_17 : f32 to vector<2x128xf32>
    %57 = arith.mulf %53, %56 : vector<2x128xf32>
    %58 = arith.mulf %55, %55 : vector<2x128xf32>
    %59 = arith.subf %57, %58 : vector<2x128xf32>
    %cst_18 = arith.constant 9.99999974E-6 : f32
    %60 = vector.broadcast %cst_18 : f32 to vector<2x128xf32>
    %61 = arith.addf %59, %60 : vector<2x128xf32>
    %62 = math.rsqrt %61 : vector<2x128xf32>
    %63 = vector.shape_cast %55 : vector<2x128xf32> to vector<2x1x128xf32>
    %64 = vector.broadcast %63 : vector<2x1x128xf32> to vector<2x16x128xf32>
    %65 = arith.subf %34, %64 : vector<2x16x128xf32>
    %66 = vector.shape_cast %62 : vector<2x128xf32> to vector<2x1x128xf32>
    %67 = vector.broadcast %66 : vector<2x1x128xf32> to vector<2x16x128xf32>
    %68 = arith.mulf %65, %67 : vector<2x16x128xf32>
    %69 = vector.shape_cast %68 : vector<2x16x128xf32> to vector<32x128xf32>
    %cst_19 = arith.constant 0.000000e+00 : f32
    %70 = vector.broadcast %cst_19 : f32 to vector<32x128xf32>
    %71 = arith.maximumf %69, %70 : vector<32x128xf32>
    %c1_i32_20 = arith.constant 1 : i32
    %72 = tpu.dynamic_rotate %71 by %c1_i32_20 dim 0 : vector<32x128xf32>, i32 -> vector<32x128xf32>
    %c31_i32_21 = arith.constant 31 : i32
    %73 = tpu.dynamic_rotate %71 by %c31_i32_21 dim 0 : vector<32x128xf32>, i32 -> vector<32x128xf32>
    %74 = vector.shape_cast %20 : vector<32x1xi1> to vector<32x1xi1>
    %75 = vector.broadcast %74 : vector<32x1xi1> to vector<32x128xi1>
    %76 = arith.select %75, %73, %72 : vector<32x128xi1>, vector<32x128xf32>
    %77 = vector.shape_cast %22 : vector<32x1xi1> to vector<32x1xi1>
    %78 = vector.broadcast %77 : vector<32x1xi1> to vector<32x128xi1>
    %79 = arith.select %78, %72, %73 : vector<32x128xi1>, vector<32x128xf32>
    %80 = tpu.concatenate %76, %71, %79 in 1 : vector<32x128xf32>, vector<32x128xf32>, vector<32x128xf32> -> vector<32x384xf32>
    %c0_22 = arith.constant 0 : index
    %c0_23 = arith.constant 0 : index
    %81 = vector.load %arg3[%c0_22, %c0_23] : memref<384x128xf32, #tpu.memory_space<vmem>>, vector<384x128xf32>
    %cst_24 = arith.constant dense<0.000000e+00> : vector<32x128xf32>
    %82 = tpu.matmul %80, %81, %cst_24 {dimension_numbers = #tpu.dot_dimension_numbers<[1], [0], [0], [1], [0, 0, 1, 1], [], []>} : vector<32x384xf32>, vector<384x128xf32>, vector<32x128xf32> -> vector<32x128xf32>
    %83 = vector.shape_cast %82 : vector<32x128xf32> to vector<2x16x128xf32>
    %cst_25 = arith.constant dense<0.000000e+00> : vector<2x128xf32>
    %84 = vector.multi_reduction <add>, %83, %cst_25 [1] : vector<2x16x128xf32> to vector<2x128xf32>
    %85 = arith.mulf %83, %83 : vector<2x16x128xf32>
    %cst_26 = arith.constant dense<0.000000e+00> : vector<2x128xf32>
    %86 = vector.multi_reduction <add>, %85, %cst_26 [1] : vector<2x16x128xf32> to vector<2x128xf32>
    %c8_i32_27 = arith.constant 8 : i32
    %87 = tpu.dynamic_rotate %84 by %c8_i32_27 dim 1 : vector<2x128xf32>, i32 -> vector<2x128xf32>
    %88 = arith.addf %84, %87 : vector<2x128xf32>
    %c8_i32_28 = arith.constant 8 : i32
    %89 = tpu.dynamic_rotate %86 by %c8_i32_28 dim 1 : vector<2x128xf32>, i32 -> vector<2x128xf32>
    %90 = arith.addf %86, %89 : vector<2x128xf32>
    %c16_i32_29 = arith.constant 16 : i32
    %91 = tpu.dynamic_rotate %88 by %c16_i32_29 dim 1 : vector<2x128xf32>, i32 -> vector<2x128xf32>
    %92 = arith.addf %88, %91 : vector<2x128xf32>
    %c16_i32_30 = arith.constant 16 : i32
    %93 = tpu.dynamic_rotate %90 by %c16_i32_30 dim 1 : vector<2x128xf32>, i32 -> vector<2x128xf32>
    %94 = arith.addf %90, %93 : vector<2x128xf32>
    %c32_i32_31 = arith.constant 32 : i32
    %95 = tpu.dynamic_rotate %92 by %c32_i32_31 dim 1 : vector<2x128xf32>, i32 -> vector<2x128xf32>
    %96 = arith.addf %92, %95 : vector<2x128xf32>
    %c32_i32_32 = arith.constant 32 : i32
    %97 = tpu.dynamic_rotate %94 by %c32_i32_32 dim 1 : vector<2x128xf32>, i32 -> vector<2x128xf32>
    %98 = arith.addf %94, %97 : vector<2x128xf32>
    %c64_i32_33 = arith.constant 64 : i32
    %99 = tpu.dynamic_rotate %96 by %c64_i32_33 dim 1 : vector<2x128xf32>, i32 -> vector<2x128xf32>
    %100 = arith.addf %96, %99 : vector<2x128xf32>
    %c64_i32_34 = arith.constant 64 : i32
    %101 = tpu.dynamic_rotate %98 by %c64_i32_34 dim 1 : vector<2x128xf32>, i32 -> vector<2x128xf32>
    %102 = arith.addf %98, %101 : vector<2x128xf32>
    %cst_35 = arith.constant 3.906250e-03 : f32
    %103 = vector.broadcast %cst_35 : f32 to vector<2x128xf32>
    %104 = arith.mulf %100, %103 : vector<2x128xf32>
    %cst_36 = arith.constant 3.906250e-03 : f32
    %105 = vector.broadcast %cst_36 : f32 to vector<2x128xf32>
    %106 = arith.mulf %102, %105 : vector<2x128xf32>
    %107 = arith.mulf %104, %104 : vector<2x128xf32>
    %108 = arith.subf %106, %107 : vector<2x128xf32>
    %cst_37 = arith.constant 9.99999974E-6 : f32
    %109 = vector.broadcast %cst_37 : f32 to vector<2x128xf32>
    %110 = arith.addf %108, %109 : vector<2x128xf32>
    %111 = math.rsqrt %110 : vector<2x128xf32>
    %112 = vector.shape_cast %104 : vector<2x128xf32> to vector<2x1x128xf32>
    %113 = vector.broadcast %112 : vector<2x1x128xf32> to vector<2x16x128xf32>
    %114 = arith.subf %83, %113 : vector<2x16x128xf32>
    %115 = vector.shape_cast %111 : vector<2x128xf32> to vector<2x1x128xf32>
    %116 = vector.broadcast %115 : vector<2x1x128xf32> to vector<2x16x128xf32>
    %117 = arith.mulf %114, %116 : vector<2x16x128xf32>
    %118 = vector.shape_cast %117 : vector<2x16x128xf32> to vector<32x128xf32>
    %119 = arith.addf %1, %118 : vector<32x128xf32>
    %120 = vector.shape_cast %119 : vector<32x128xf32> to vector<2x16x128xf32>
    %c0_38 = arith.constant 0 : index
    %c0_39 = arith.constant 0 : index
    %c0_40 = arith.constant 0 : index
    %121 = vector.load %arg4[%c0_38, %c0_39, %c0_40] : memref<2x16x128xf32, #tpu.memory_space<vmem>>, vector<2x16x128xf32>
    tpu.vector_store %arg4[%c0_38, %c0_39, %c0_40], %120 {strides = array<i32>} : memref<2x16x128xf32, #tpu.memory_space<vmem>>, vector<2x16x128xf32>,
    return
  }
  func.func @transform_0(%arg0: i32) -> (i32, i32, i32) {
    %c0_i32 = arith.constant 0 : i32
    %c0_i32_0 = arith.constant 0 : i32
    %c0_i32_1 = arith.constant 0 : i32
    return %arg0, %c0_i32, %c0_i32_0 : i32, i32, i32
  }
  func.func @transform_1(%arg0: i32) -> (i32, i32) {
    %c0_i32 = arith.constant 0 : i32
    %c0_i32_0 = arith.constant 0 : i32
    %c0_i32_1 = arith.constant 0 : i32
    return %c0_i32, %c0_i32_0 : i32, i32
  }
  func.func @transform_2(%arg0: i32) -> (i32, i32) {
    %c0_i32 = arith.constant 0 : i32
    %c0_i32_0 = arith.constant 0 : i32
    %c0_i32_1 = arith.constant 0 : i32
    return %c0_i32, %c0_i32_0 : i32, i32
  }
  func.func @transform_3(%arg0: i32) -> (i32, i32, i32) {
    %c0_i32 = arith.constant 0 : i32
    %c0_i32_0 = arith.constant 0 : i32
    %c0_i32_1 = arith.constant 0 : i32
    return %arg0, %c0_i32, %c0_i32_0 : i32, i32, i32
  }
}

</mosaic_0001>

<llo_original>
// kernel: resnet_block.1
$region0: #{resnet_block.1}
  #allocation0 [shape = 'u32[]', space=smem, size = 0x4, offset = 0x4, fixed_abs, tag = 'smem constant byte address 0x4 - core index']
  #allocation1 [shape = 'u32[144,128]{1,0:T(1,128)}', space=vmem, size = 0x12000, scoped, tag = 'internal scratch']
  %s0 = inlined_call_operand.vmem [shape: f32[4,16,128], index: 0, kind: input, shape index: {}]
  %s1 = inlined_call_operand.vmem [shape: f32[384,128], index: 1, kind: input, shape index: {}]
  %s2 = inlined_call_operand.vmem [shape: f32[384,128], index: 2, kind: input, shape index: {}]
  %s3 = inlined_call_operand.vmem [shape: f32[4,16,128], index: 3, kind: output, shape index: {}]
  %s4 = sld [smem:[#allocation0]]
  $region45: #{resnet_block.1} parent=0
    _
  %s6 = ssub.s32 1, %s4
  %s7 = scalar_select 0, %s6, %s4
  loop: start=0, step=1, limit=4
  $region2: #{resnet_block.1} parent=0 // loop_pre_header
    _
  $region3: #{resnet_block.1} parent=0 // loop_header
    %s9 = sphi 0, %s13
    %p10 = scmp.ge.s32.totalorder %s9, 4
    %s19 = sphi 0, %s21
    %s22 = sphi 0, %s19
    %s23 = sphi 0, %s22
    %s39 = sphi 0, %s23
    %s43 = sphi 0, %s43
    %s45 = sphi 0, %s43
    %s46 = sphi 0, %s45
    %s60 = sphi 0, %s46
    %s64 = sphi 0, %s64
    %s66 = sphi 0, %s64
    %s67 = sphi 0, %s66
    %s81 = sphi 0, %s67
    %s87 = sphi 0, %s89
    %s90 = sphi 0, %s87
    %s91 = sphi 0, %s90
    %s107 = sphi 0, %s91
  $region4: #{resnet_block.1} parent=0 // loop_header_branch
    %12 = sbr.rel (%p10) target = $region8
  $region5: #{resnet_block.1} parent=0 // loop_body
    %s14 = ssub.s32 %s9, 1
    %s15 = ssub.s32 %s9, 2
    %s16 = sadd.s32 %s9, 1
    %s17 = ssub.s32 %s9, %s16
    %p18 = scmp.eq.s32.totalorder %s17, 0
    %s20 = sadd.s32 %s19, 1
    %s21 = scalar_select %p18, %s19, %s20
    %p24 = pneg %p18
    %p25 = scmp.eq.s32.totalorder %s9, 1
    %p26 = por %p24, %p25
    %p27 = scmp.ne.s32.totalorder %s19, %s22
    %p28 = scmp.eq.s32.totalorder %s9, 0
    %p29 = por %p27, %p28
    %p30 = scmp.ne.s32.totalorder %s19, %s22
    %p31 = scmp.eq.s32.totalorder %s14, 1
    %p32 = por %p30, %p31
    %p33 = scmp.ne.s32.totalorder %s22, %s23
    %p34 = scmp.eq.s32.totalorder %s14, 0
    %p35 = por %p33, %p34
    %p36 = scmp.ne.s32.totalorder %s22, %s23
    %p37 = scmp.eq.s32.totalorder %s15, 1
    %p38 = por %p36, %p37
    %p40 = scmp.ne.s32.totalorder %s23, %s39
    %p41 = scmp.eq.s32.totalorder %s15, 0
    %p42 = por %p40, %p41
    %s44 = sadd.s32 %s43, 1
    %p47 = scmp.eq.s32.totalorder %s9, 1
    %p48 = scmp.ne.s32.totalorder %s43, %s45
    %p49 = scmp.eq.s32.totalorder %s9, 0
    %p50 = por %p48, %p49
    %p51 = scmp.ne.s32.totalorder %s43, %s45
    %p52 = scmp.eq.s32.totalorder %s14, 1
    %p53 = por %p51, %p52
    %p54 = scmp.ne.s32.totalorder %s45, %s46
    %p55 = scmp.eq.s32.totalorder %s14, 0
    %p56 = por %p54, %p55
    %p57 = scmp.ne.s32.totalorder %s45, %s46
    %p58 = scmp.eq.s32.totalorder %s15, 1
    %p59 = por %p57, %p58
    %p61 = scmp.ne.s32.totalorder %s46, %s60
    %p62 = scmp.eq.s32.totalorder %s15, 0
    %p63 = por %p61, %p62
    %s65 = sadd.s32 %s64, 1
    %p68 = scmp.eq.s32.totalorder %s9, 1
    %p69 = scmp.ne.s32.totalorder %s64, %s66
    %p70 = scmp.eq.s32.totalorder %s9, 0
    %p71 = por %p69, %p70
    %p72 = scmp.ne.s32.totalorder %s64, %s66
    %p73 = scmp.eq.s32.totalorder %s14, 1
    %p74 = por %p72, %p73
    %p75 = scmp.ne.s32.totalorder %s66, %s67
    %p76 = scmp.eq.s32.totalorder %s14, 0
    %p77 = por %p75, %p76
    %p78 = scmp.ne.s32.totalorder %s66, %s67
    %p79 = scmp.eq.s32.totalorder %s15, 1
    %p80 = por %p78, %p79
    %p82 = scmp.ne.s32.totalorder %s67, %s81
    %p83 = scmp.eq.s32.totalorder %s15, 0
    %p84 = por %p82, %p83
    %s85 = ssub.s32 %s9, %s16
    %p86 = scmp.eq.s32.totalorder %s85, 0
    %s88 = sadd.s32 %s87, 1
    %s89 = scalar_select %p86, %s87, %s88
    %p92 = pneg %p86
    %p93 = scmp.eq.s32.totalorder %s9, 1
    %p94 = por %p92, %p93
    %p95 = scmp.ne.s32.totalorder %s87, %s90
    %p96 = scmp.eq.s32.totalorder %s9, 0
    %p97 = por %p95, %p96
    %p98 = scmp.ne.s32.totalorder %s87, %s90
    %p99 = scmp.eq.s32.totalorder %s14, 1
    %p100 = por %p98, %p99
    %p101 = scmp.ne.s32.totalorder %s90, %s91
    %p102 = scmp.eq.s32.totalorder %s14, 0
    %p103 = por %p101, %p102
    %p104 = scmp.ne.s32.totalorder %s90, %s91
    %p105 = scmp.eq.s32.totalorder %s15, 1
    %p106 = por %p104, %p105
    %p108 = scmp.ne.s32.totalorder %s91, %s107
    %p109 = scmp.eq.s32.totalorder %s15, 0
    %p110 = por %p108, %p109
    %p111 = scmp.le.s32.totalorder 1, %s9
    %p112 = scmp.lt.s32.totalorder %s9, 3
    %p113 = pnand %p111, %p112
    %p114 = pneg %p113
    // Predicated region
    $region9: #{resnet_block.1} parent=5 // pred_check
      _
    $region10: #{resnet_block.1} parent=5 // pred_check_branch
      %116 = sbr.rel (%p113) target = $region12
    $region11: #{resnet_block.1} parent=5 // pred_region
      %s117 = ssub.s32 %s9, 1
      // Predicated region
      $region13: #{resnet_block.1} parent=11 // pred_check
        %p118 = pneg %p56
      $region14: #{resnet_block.1} parent=11 // pred_check_branch
        %120 = sbr.rel (%p118) target = $region16
      $region15: #{resnet_block.1} parent=11 // pred_region
        _
      $region16: #{resnet_block.1} parent=11 // pred_fallthru
        _
      // Predicated region
      $region17: #{resnet_block.1} parent=11 // pred_check
        %p121 = pneg %p77
      $region18: #{resnet_block.1} parent=11 // pred_check_branch
        %123 = sbr.rel (%p121) target = $region20
      $region19: #{resnet_block.1} parent=11 // pred_region
        _
      $region20: #{resnet_block.1} parent=11 // pred_fallthru
        _
    $region12: #{resnet_block.1} parent=5 // pred_fallthru
      _
    %p124 = scmp.lt.s32.totalorder %s9, 2
    // Predicated region
    $region21: #{resnet_block.1} parent=5 // pred_check
      %p125 = pneg %p124
    $region22: #{resnet_block.1} parent=5 // pred_check_branch
      %127 = sbr.rel (%p125) target = $region24
    $region23: #{resnet_block.1} parent=5 // pred_region
      // Predicated region
      $region25: #{resnet_block.1} parent=23 // pred_check
        %p128 = pneg %p29
      $region26: #{resnet_block.1} parent=23 // pred_check_branch
        %130 = sbr.rel (%p128) target = $region28
      $region27: #{resnet_block.1} parent=23 // pred_region
        %s131 = smul.u32 2, %s9
        %p132 = scmp.lt.s32.totalorder %s131, 3
        %s133 = scalar_select %p132, %s131, 3
        %s134 = smul.addr %s133, 2
        %s135 = smul.addr %s134, 8
        %s136 = scalar_lea.vmem %s0, %s135
        %s137 = smul.u32 2, %s9
      $region28: #{resnet_block.1} parent=23 // pred_fallthru
        _
    $region24: #{resnet_block.1} parent=5 // pred_fallthru
      _
    %p138 = scmp.le.s32.totalorder 1, %s9
    %p139 = scmp.lt.s32.totalorder %s9, 3
    %p140 = pnand %p138, %p139
    %p141 = pneg %p140
    // Predicated region
    $region29: #{resnet_block.1} parent=5 // pred_check
      _
    $region30: #{resnet_block.1} parent=5 // pred_check_branch
      %143 = sbr.rel (%p140) target = $region32
    $region31: #{resnet_block.1} parent=5 // pred_region
      %s144 = ssub.s32 %s9, 1
      %s145 = smul.u32 2, %s14
      %p146 = scmp.lt.s32.totalorder %s145, 3
      %s147 = scalar_select %p146, %s145, 3
      %s148 = smul.addr %s147, 2
      %s149 = smul.addr %s148, 8
      %s150 = scalar_lea.vmem %s0, %s149
      %p151 = pneg %p35
      %p152 = pneg %p32
      %p153 = pneg %p56
      %p154 = pneg %p53
      %p155 = pneg %p77
      %p156 = pneg %p74
      %p157 = pneg %p103
      %p158 = pneg %p100
      %s159 = smul.u32 2, %s14
      %p160 = scmp.lt.s32.totalorder %s159, 3
      %s161 = scalar_select %p160, %s159, 3
      %s162 = smul.addr %s161, 2
      %s163 = smul.addr %s162, 8
      %s164 = scalar_lea.vmem %s3, %s163
      %s165 = smul.u32 2, %s14
      %p166 = scmp.lt.s32.totalorder %s165, 3
      %s167 = scalar_select %p166, %s165, 3
      %s168 = smul.addr %s167, 2
      %s169 = smul.addr %s168, 8
      %s170 = scalar_lea.vmem %s0, %s169
      %s171 = smul.u32 2, %s14
      %s172 = smul.u32 2, %s14
      %p173 = scmp.lt.s32.totalorder %s172, 3
      %s174 = scalar_select %p173, %s172, 3
      %s175 = smul.addr %s174, 2
      %s176 = smul.addr %s175, 8
      %s177 = scalar_lea.vmem %s3, %s176
      %s178 = smul.u32 2, %s14
      %v179 = vld [vmem:[%s170] sm:$0xff]
      %v180 = vld [vmem:[%s170 + $0x8] sm:$0xff]
      %v181 = vld [vmem:[%s170 + $0x10] sm:$0xff]
      %v182 = vld [vmem:[%s170 + $0x18] sm:$0xff]
      %v183 = vlaneseq
      %v184 = vshrl.u32 %v183, 7
      %v185 = vadd.s32 %v184, 8
      %v186 = vadd.s32 %v184, 16
      %v187 = vadd.s32 %v184, 24
      %vm188 = vcmp.lt.s32.totalorder %v184, 0
      %v189 = vsub.s32 0, %v184
      %v190 = vsel %vm188, %v189, %v184
      %v191 = vshrl.u32 %v190, 4
      %v192 = vand.u32 %v190, 15
      %v193 = vsub.s32 0, %v192
      %v194 = vsel %vm188, %v193, %v192
      %vm195 = vcmp.lt.s32.totalorder %v185, 0
      %v196 = vsub.s32 0, %v185
      %v197 = vsel %vm195, %v196, %v185
      %v198 = vshrl.u32 %v197, 4
      %v199 = vand.u32 %v197, 15
      %v200 = vsub.s32 0, %v199
      %v201 = vsel %vm195, %v200, %v199
      %vm202 = vcmp.lt.s32.totalorder %v186, 0
      %v203 = vsub.s32 0, %v186
      %v204 = vsel %vm202, %v203, %v186
      %v205 = vshrl.u32 %v204, 4
      %v206 = vand.u32 %v204, 15
      %v207 = vsub.s32 0, %v206
      %v208 = vsel %vm202, %v207, %v206
      %vm209 = vcmp.lt.s32.totalorder %v187, 0
      %v210 = vsub.s32 0, %v187
      %v211 = vsel %vm209, %v210, %v187
      %v212 = vshrl.u32 %v211, 4
      %v213 = vand.u32 %v211, 15
      %v214 = vsub.s32 0, %v213
      %v215 = vsel %vm209, %v214, %v213
      %vm216 = vcmp.ne.s32.totalorder %v194, 0
      %vm217 = vcmp.ne.s32.totalorder %v201, 0
      %vm218 = vcmp.ne.s32.totalorder %v208, 0
      %vm219 = vcmp.ne.s32.totalorder %v215, 0
      %vm220 = vcmp.lt.s32.totalorder %v194, 0
      %vm221 = vcmp.lt.s32.totalorder %v201, 0
      %vm222 = vcmp.lt.s32.totalorder %v208, 0
      %vm223 = vcmp.lt.s32.totalorder %v215, 0
      %vm224 = vmand %vm220, %vm216
      %vm225 = vmand %vm221, %vm217
      %vm226 = vmand %vm222, %vm218
      %vm227 = vmand %vm223, %vm219
      %v228 = vadd.s32 %v194, 16
      %v229 = vadd.s32 %v201, 16
      %v230 = vadd.s32 %v208, 16
      %v231 = vadd.s32 %v215, 16
      %v232 = vsel %vm224, %v228, %v194
      %v233 = vsel %vm225, %v229, %v201
      %v234 = vsel %vm226, %v230, %v208
      %v235 = vsel %vm227, %v231, %v215
      %vm236 = vcmp.eq.s32.totalorder %v232, 0
      %vm237 = vcmp.eq.s32.totalorder %v233, 0
      %vm238 = vcmp.eq.s32.totalorder %v234, 0
      %vm239 = vcmp.eq.s32.totalorder %v235, 0
      %vm240 = vcmp.eq.s32.totalorder %v232, 15
      %vm241 = vcmp.eq.s32.totalorder %v233, 15
      %vm242 = vcmp.eq.s32.totalorder %v234, 15
      %vm243 = vcmp.eq.s32.totalorder %v235, 15
      %v244 = vrot.slane %v179, 7
      %v245 = vrot.slane %v180, 7
      %v246 = vrot.slane %v181, 7
      %v247 = vrot.slane %v182, 7
      %vm248 = vcmp.lt.s32.totalorder %v184, 1
      %v249 = vsel %vm248, %v246, %v247
      %v250 = vsel %vm248, %v245, %v246
      %v251 = vsel %vm248, %v244, %v245
      %v252 = vsel %vm248, %v247, %v244
      %v253 = vrot.slane %v179, 1
      %v254 = vrot.slane %v180, 1
      %v255 = vrot.slane %v181, 1
      %v256 = vrot.slane %v182, 1
      %vm257 = vcmp.lt.s32.totalorder %v184, 7
      %v258 = vsel %vm257, %v255, %v256
      %v259 = vsel %vm257, %v254, %v255
      %v260 = vsel %vm257, %v253, %v254
      %v261 = vsel %vm257, %v256, %v253
      %v262 = vsel %vm236, 1, 0
      %v263 = vsel %vm237, 1, 0
      %v264 = vsel %vm238, 1, 0
      %v265 = vsel %vm239, 1, 0
      %vm266 = vcmp.eq.s32.totalorder %v262, 1
      %vm267 = vcmp.eq.s32.totalorder %v263, 1
      %vm268 = vcmp.eq.s32.totalorder %v264, 1
      %vm269 = vcmp.eq.s32.totalorder %v265, 1
      %v270 = vsel %vm266, %v260, %v252
      %v271 = vsel %vm267, %v259, %v251
      %v272 = vsel %vm268, %v258, %v250
      %v273 = vsel %vm269, %v261, %v249
      %v274 = vsel %vm240, 1, 0
      %v275 = vsel %vm241, 1, 0
      %v276 = vsel %vm242, 1, 0
      %v277 = vsel %vm243, 1, 0
      %vm278 = vcmp.eq.s32.totalorder %v274, 1
      %vm279 = vcmp.eq.s32.totalorder %v275, 1
      %vm280 = vcmp.eq.s32.totalorder %v276, 1
      %vm281 = vcmp.eq.s32.totalorder %v277, 1
      %v282 = vsel %vm278, %v252, %v260
      %v283 = vsel %vm279, %v251, %v259
      %v284 = vsel %vm280, %v250, %v258
      %v285 = vsel %vm281, %v249, %v261
      %v286 = vld [vmem:[%s1] sm:$0xff]
      %v287 = vld [vmem:[%s1 + $0x8] sm:$0xff]
      %v288 = vld [vmem:[%s1 + $0x10] sm:$0xff]
      %v289 = vld [vmem:[%s1 + $0x18] sm:$0xff]
      %v290 = vld [vmem:[%s1 + $0x20] sm:$0xff]
      %v291 = vld [vmem:[%s1 + $0x28] sm:$0xff]
      %v292 = vld [vmem:[%s1 + $0x30] sm:$0xff]
      %v293 = vld [vmem:[%s1 + $0x38] sm:$0xff]
      %v294 = vld [vmem:[%s1 + $0x40] sm:$0xff]
      %v295 = vld [vmem:[%s1 + $0x48] sm:$0xff]
      %v296 = vld [vmem:[%s1 + $0x50] sm:$0xff]
      %v297 = vld [vmem:[%s1 + $0x58] sm:$0xff]
      %v298 = vld [vmem:[%s1 + $0x60] sm:$0xff]
      %v299 = vld [vmem:[%s1 + $0x68] sm:$0xff]
      %v300 = vld [vmem:[%s1 + $0x70] sm:$0xff]
      %v301 = vld [vmem:[%s1 + $0x78] sm:$0xff]
      %v302 = vld [vmem:[%s1 + $0x80] sm:$0xff]
      %v303 = vld [vmem:[%s1 + $0x88] sm:$0xff]
      %v304 = vld [vmem:[%s1 + $0x90] sm:$0xff]
      %v305 = vld [vmem:[%s1 + $0x98] sm:$0xff]
      %v306 = vld [vmem:[%s1 + $0xa0] sm:$0xff]
      %v307 = vld [vmem:[%s1 + $0xa8] sm:$0xff]
      %v308 = vld [vmem:[%s1 + $0xb0] sm:$0xff]
      %v309 = vld [vmem:[%s1 + $0xb8] sm:$0xff]
      %v310 = vld [vmem:[%s1 + $0xc0] sm:$0xff]
      %v311 = vld [vmem:[%s1 + $0xc8] sm:$0xff]
      %v312 = vld [vmem:[%s1 + $0xd0] sm:$0xff]
      %v313 = vld [vmem:[%s1 + $0xd8] sm:$0xff]
      %v314 = vld [vmem:[%s1 + $0xe0] sm:$0xff]
      %v315 = vld [vmem:[%s1 + $0xe8] sm:$0xff]
      %v316 = vld [vmem:[%s1 + $0xf0] sm:$0xff]
      %v317 = vld [vmem:[%s1 + $0xf8] sm:$0xff]
      %v318 = vld [vmem:[%s1 + $0x100] sm:$0xff]
      %v319 = vld [vmem:[%s1 + $0x108] sm:$0xff]
      %v320 = vld [vmem:[%s1 + $0x110] sm:$0xff]
      %v321 = vld [vmem:[%s1 + $0x118] sm:$0xff]
      %v322 = vld [vmem:[%s1 + $0x120] sm:$0xff]
      %v323 = vld [vmem:[%s1 + $0x128] sm:$0xff]
      %v324 = vld [vmem:[%s1 + $0x130] sm:$0xff]
      %v325 = vld [vmem:[%s1 + $0x138] sm:$0xff]
      %v326 = vld [vmem:[%s1 + $0x140] sm:$0xff]
      %v327 = vld [vmem:[%s1 + $0x148] sm:$0xff]
      %v328 = vld [vmem:[%s1 + $0x150] sm:$0xff]
      %v329 = vld [vmem:[%s1 + $0x158] sm:$0xff]
      %v330 = vld [vmem:[%s1 + $0x160] sm:$0xff]
      %v331 = vld [vmem:[%s1 + $0x168] sm:$0xff]
      %v332 = vld [vmem:[%s1 + $0x170] sm:$0xff]
      %v333 = vld [vmem:[%s1 + $0x178] sm:$0xff]
      %334 = vmatprep.subr.mxu0 0.0
      %335 = vmatpush1.msra.mxu0 %v286
      %336 = vmatprep.subr.mxu0 0.0
      %337 = vmatpush1.msra.mxu0 %v287
      %338 = vmatprep.subr.mxu0 0.0
      %339 = vmatpush1.msra.mxu0 %v288
      %340 = vmatprep.subr.mxu0 0.0
      %341 = vmatpush1.msra.mxu0 %v289
      %342 = vmatprep.subr.mxu0 0.0
      %343 = vmatpush1.msra.mxu0 %v290
      %344 = vmatprep.subr.mxu0 0.0
      %345 = vmatpush1.msra.mxu0 %v291
      %346 = vmatprep.subr.mxu0 0.0
      %347 = vmatpush1.msra.mxu0 %v292
      %348 = vmatprep.subr.mxu0 0.0
      %349 = vmatpush1.msra.mxu0 %v293
      %350 = vmatprep.subr.mxu0 0.0
      %351 = vmatpush1.msra.mxu0 %v294
      %352 = vmatprep.subr.mxu0 0.0
      %353 = vmatpush1.msra.mxu0 %v295
      %354 = vmatprep.subr.mxu0 0.0
      %355 = vmatpush1.msra.mxu0 %v296
      %356 = vmatprep.subr.mxu0 0.0
      %357 = vmatpush1.msra.mxu0 %v297
      %358 = vmatprep.subr.mxu0 0.0
      %359 = vmatpush1.msra.mxu0 %v298
      %360 = vmatprep.subr.mxu0 0.0
      %361 = vmatpush1.msra.mxu0 %v299
      %362 = vmatprep.subr.mxu0 0.0
      %363 = vmatpush1.msra.mxu0 %v300
      %364 = vmatprep.subr.mxu0 0.0
      %365 = vmatpush1.msra.mxu0 %v301
      %366 = vmatprep.subr.mxu0 0.0
      %367 = vmatpush1.msra.mxu0 %v302
      %368 = vmatprep.subr.mxu0 0.0
      %369 = vmatpush1.msra.mxu0 %v303
      %370 = vmatprep.subr.mxu0 0.0
      %371 = vmatpush1.msra.mxu0 %v304
      %372 = vmatprep.subr.mxu0 0.0
      %373 = vmatpush1.msra.mxu0 %v305
      %374 = vmatprep.subr.mxu0 0.0
      %375 = vmatpush1.msra.mxu0 %v306
      %376 = vmatprep.subr.mxu0 0.0
      %377 = vmatpush1.msra.mxu0 %v307
      %378 = vmatprep.subr.mxu0 0.0
      %379 = vmatpush1.msra.mxu0 %v308
      %380 = vmatprep.subr.mxu0 0.0
      %381 = vmatpush1.msra.mxu0 %v309
      %382 = vmatprep.subr.mxu0 0.0
      %383 = vmatpush1.msra.mxu0 %v310
      %384 = vmatprep.subr.mxu0 0.0
      %385 = vmatpush1.msra.mxu0 %v311
      %386 = vmatprep.subr.mxu0 0.0
      %387 = vmatpush1.msra.mxu0 %v312
      %388 = vmatprep.subr.mxu0 0.0
      %389 = vmatpush1.msra.mxu0 %v313
      %390 = vmatprep.subr.mxu0 0.0
      %391 = vmatpush1.msra.mxu0 %v314
      %392 = vmatprep.subr.mxu0 0.0
      %393 = vmatpush1.msra.mxu0 %v315
      %394 = vmatprep.subr.mxu0 0.0
      %395 = vmatpush1.msra.mxu0 %v316
      %396 = vmatprep.subr.mxu0 0.0
      %397 = vmatpush1.msra.mxu0 %v317
      %398 = vmatprep.mubr.f32.mxu0 %v179
      %399 = vmatmul.mubr.f32.gmra.mrb[0].mxu0 %v270
      %v400 = vpop.f32.mrb[0].mxu0
      %v401 = vadd.f32 0.0, %v400
      %v402 = vpop.f32.mrb[0].mxu0
      %403 = vmatprep.mubr.f32.mxu0 %v180
      %404 = vmatmul.mubr.f32.gmra.mrb[0].mxu0 %v271
      %v405 = vpop.f32.mrb[0].mxu0
      %v406 = vadd.f32 0.0, %v405
      %v407 = vpop.f32.mrb[0].mxu0
      %408 = vmatprep.mubr.f32.mxu0 %v181
      %409 = vmatmul.mubr.f32.gmra.mrb[0].mxu0 %v272
      %v410 = vpop.f32.mrb[0].mxu0
      %v411 = vadd.f32 0.0, %v410
      %v412 = vpop.f32.mrb[0].mxu0
      %413 = vmatprep.mubr.f32.mxu0 %v182
      %414 = vmatmul.mubr.f32.gmra.mrb[0].mxu0 %v273
      %v415 = vpop.f32.mrb[0].mxu0
      %v416 = vadd.f32 0.0, %v415
      %v417 = vpop.f32.mrb[0].mxu0
      %418 = vdwg.mxu0
      %419 = vmatprep.subr.mxu0 0.0
      %420 = vmatpush1.msra.mxu0 %v318
      %421 = vmatprep.subr.mxu0 0.0
      %422 = vmatpush1.msra.mxu0 %v319
      %423 = vmatprep.subr.mxu0 0.0
      %424 = vmatpush1.msra.mxu0 %v320
      %425 = vmatprep.subr.mxu0 0.0
      %426 = vmatpush1.msra.mxu0 %v321
      %427 = vmatprep.subr.mxu0 0.0
      %428 = vmatpush1.msra.mxu0 %v322
      %429 = vmatprep.subr.mxu0 0.0
      %430 = vmatpush1.msra.mxu0 %v323
      %431 = vmatprep.subr.mxu0 0.0
      %432 = vmatpush1.msra.mxu0 %v324
      %433 = vmatprep.subr.mxu0 0.0
      %434 = vmatpush1.msra.mxu0 %v325
      %435 = vmatprep.subr.mxu0 0.0
      %436 = vmatpush1.msra.mxu0 %v326
      %437 = vmatprep.subr.mxu0 0.0
      %438 = vmatpush1.msra.mxu0 %v327
      %439 = vmatprep.subr.mxu0 0.0
      %440 = vmatpush1.msra.mxu0 %v328
      %441 = vmatprep.subr.mxu0 0.0
      %442 = vmatpush1.msra.mxu0 %v329
      %443 = vmatprep.subr.mxu0 0.0
      %444 = vmatpush1.msra.mxu0 %v330
      %445 = vmatprep.subr.mxu0 0.0
      %446 = vmatpush1.msra.mxu0 %v331
      %447 = vmatprep.subr.mxu0 0.0
      %448 = vmatpush1.msra.mxu0 %v332
      %449 = vmatprep.subr.mxu0 0.0
      %450 = vmatpush1.msra.mxu0 %v333
      %451 = vmatprep.subr.mxu0 0.0
      %452 = vmatpush1.msra.mxu0 0.0
      %453 = vmatprep.subr.mxu0 0.0
      %454 = vmatpush1.msra.mxu0 0.0
      %455 = vmatprep.subr.mxu0 0.0
      %456 = vmatpush1.msra.mxu0 0.0
      %457 = vmatprep.subr.mxu0 0.0
      %458 = vmatpush1.msra.mxu0 0.0
      %459 = vmatprep.subr.mxu0 0.0
      %460 = vmatpush1.msra.mxu0 0.0
      %461 = vmatprep.subr.mxu0 0.0
      %462 = vmatpush1.msra.mxu0 0.0
      %463 = vmatprep.subr.mxu0 0.0
      %464 = vmatpush1.msra.mxu0 0.0
      %465 = vmatprep.subr.mxu0 0.0
      %466 = vmatpush1.msra.mxu0 0.0
      %467 = vmatprep.subr.mxu0 0.0
      %468 = vmatpush1.msra.mxu0 0.0
      %469 = vmatprep.subr.mxu0 0.0
      %470 = vmatpush1.msra.mxu0 0.0
      %471 = vmatprep.subr.mxu0 0.0
      %472 = vmatpush1.msra.mxu0 0.0
      %473 = vmatprep.subr.mxu0 0.0
      %474 = vmatpush1.msra.mxu0 0.0
      %475 = vmatprep.subr.mxu0 0.0
      %476 = vmatpush1.msra.mxu0 0.0
      %477 = vmatprep.subr.mxu0 0.0
      %478 = vmatpush1.msra.mxu0 0.0
      %479 = vmatprep.subr.mxu0 0.0
      %480 = vmatpush1.msra.mxu0 0.0
      %481 = vmatprep.subr.mxu0 0.0
      %482 = vmatpush1.msra.mxu0 0.0
      %483 = vmatprep.mubr.f32.mxu0 0.0
      %484 = vmatmul.mubr.f32.gmra.mrb[0].mxu0 %v282
      %v485 = vpop.f32.mrb[0].mxu0
      %v486 = vadd.f32 %v401, %v485
      %v487 = vpop.f32.mrb[0].mxu0
      %488 = vmatprep.mubr.f32.mxu0 0.0
      %489 = vmatmul.mubr.f32.gmra.mrb[0].mxu0 %v283
      %v490 = vpop.f32.mrb[0].mxu0
      %v491 = vadd.f32 %v406, %v490
      %v492 = vpop.f32.mrb[0].mxu0
      %493 = vmatprep.mubr.f32.mxu0 0.0
      %494 = vmatmul.mubr.f32.gmra.mrb[0].mxu0 %v284
      %v495 = vpop.f32.mrb[0].mxu0
      %v496 = vadd.f32 %v411, %v495
      %v497 = vpop.f32.mrb[0].mxu0
      %498 = vmatprep.mubr.f32.mxu0 0.0
      %499 = vmatmul.mubr.f32.gmra.mrb[0].mxu0 %v285
      %v500 = vpop.f32.mrb[0].mxu0
      %v501 = vadd.f32 %v416, %v500
      %v502 = vpop.f32.mrb[0].mxu0
      %503 = vdwg.mxu0
      %v504 = vadd.f32 %v486, %v491
      %v505 = vrot.slane %v504, 4
      %v506 = vadd.f32 %v504, %v505
      %v507 = vrot.slane %v506, 2
      %v508 = vadd.f32 %v506, %v507
      %v509 = vrot.slane %v508, 1
      %v510 = vadd.f32 %v508, %v509
      %v511 = vadd.f32 %v496, %v501
      %v512 = vrot.slane %v511, 4
      %v513 = vadd.f32 %v511, %v512
      %v514 = vrot.slane %v513, 2
      %v515 = vadd.f32 %v513, %v514
      %v516 = vrot.slane %v515, 1
      %v517 = vadd.f32 %v515, %v516
      %v518 = vmul.f32 %v486, %v486
      %v519 = vmul.f32 %v491, %v491
      %v520 = vmul.f32 %v496, %v496
      %v521 = vmul.f32 %v501, %v501
      %v522 = vadd.f32 %v518, %v519
      %v523 = vrot.slane %v522, 4
      %v524 = vadd.f32 %v522, %v523
      %v525 = vrot.slane %v524, 2
      %v526 = vadd.f32 %v524, %v525
      %v527 = vrot.slane %v526, 1
      %v528 = vadd.f32 %v526, %v527
      %v529 = vadd.f32 %v520, %v521
      %v530 = vrot.slane %v529, 4
      %v531 = vadd.f32 %v529, %v530
      %v532 = vrot.slane %v531, 2
      %v533 = vadd.f32 %v531, %v532
      %v534 = vrot.slane %v533, 1
      %v535 = vadd.f32 %v533, %v534
      %vm538 = vcmask 1041409
      %v539 = vsel %vm538, %v517, %v510
      %541 = vrot.lane.b32.xlu0 %v539, 8
      %v542 = vpop.permute.xlu0 %541
      %v544 = vrot.slane %v542, 1
      %v547 = vadd.f32 %v510, %v542
      %v548 = vadd.f32 %v517, %v544
      %v551 = vsel %vm538, %v535, %v528
      %553 = vrot.lane.b32.xlu0 %v551, 8
      %v554 = vpop.permute.xlu0 %553
      %v556 = vrot.slane %v554, 1
      %v559 = vadd.f32 %v528, %v554
      %v560 = vadd.f32 %v535, %v556
      %v563 = vrot.slane %v548, 7
      %v564 = vsel %vm538, %v563, %v547
      %566 = vrot.lane.b32.xlu0 %v564, 16
      %v567 = vpop.permute.xlu0 %566
      %v569 = vrot.slane %v567, 1
      %v572 = vadd.f32 %v547, %v567
      %v573 = vadd.f32 %v548, %v569
      %v576 = vrot.slane %v560, 7
      %v577 = vsel %vm538, %v576, %v559
      %579 = vrot.lane.b32.xlu0 %v577, 16
      %v580 = vpop.permute.xlu0 %579
      %v582 = vrot.slane %v580, 1
      %v585 = vadd.f32 %v559, %v580
      %v586 = vadd.f32 %v560, %v582
      %v589 = vrot.slane %v573, 7
      %v590 = vsel %vm538, %v589, %v572
      %592 = vrot.lane.b32.xlu0 %v590, 32
      %v593 = vpop.permute.xlu0 %592
      %v595 = vrot.slane %v593, 1
      %v598 = vadd.f32 %v572, %v593
      %v599 = vadd.f32 %v573, %v595
      %v602 = vrot.slane %v586, 7
      %v603 = vsel %vm538, %v602, %v585
      %605 = vrot.lane.b32.xlu0 %v603, 32
      %v606 = vpop.permute.xlu0 %605
      %v608 = vrot.slane %v606, 1
      %v611 = vadd.f32 %v585, %v606
      %v612 = vadd.f32 %v586, %v608
      %v615 = vrot.slane %v599, 7
      %v616 = vsel %vm538, %v615, %v598
      %618 = vrot.lane.b32.xlu0 %v616, 64
      %v619 = vpop.permute.xlu0 %618
      %v621 = vrot.slane %v619, 1
      %v624 = vadd.f32 %v598, %v619
      %v625 = vadd.f32 %v599, %v621
      %v628 = vrot.slane %v612, 7
      %v629 = vsel %vm538, %v628, %v611
      %631 = vrot.lane.b32.xlu0 %v629, 64
      %v632 = vpop.permute.xlu0 %631
      %v634 = vrot.slane %v632, 1
      %v637 = vadd.f32 %v611, %v632
      %v638 = vadd.f32 %v612, %v634
      %v639 = vmul.f32 %v624, 0.00390625
      %v640 = vmul.f32 %v625, 0.00390625
      %v641 = vmul.f32 %v637, 0.00390625
      %v642 = vmul.f32 %v638, 0.00390625
      %v643 = vmul.f32 %v639, %v639
      %v644 = vmul.f32 %v640, %v640
      %v645 = vsub.f32 %v641, %v643
      %v646 = vsub.f32 %v642, %v644
      %v647 = vadd.f32 %v645, 1e-05
      %v648 = vadd.f32 %v646, 1e-05
      %v649 = vrsqrt.pop %v647
      %v650 = vrsqrt.pop %v648
      %v651 = vlaneseq
      %v652 = vshrl.u32 %v651, 7
      %v653 = vsub.s32 0, %v652
      %v654 = vrot.slane %v639, %v653
      %v655 = vlaneseq
      %v656 = vshrl.u32 %v655, 7
      %v657 = vsub.s32 0, %v656
      %v658 = vrot.slane %v640, %v657
      %v659 = vsub.f32 %v486, %v654
      %v660 = vsub.f32 %v491, %v654
      %v661 = vsub.f32 %v496, %v658
      %v662 = vsub.f32 %v501, %v658
      %v663 = vlaneseq
      %v664 = vshrl.u32 %v663, 7
      %v665 = vsub.s32 0, %v664
      %v666 = vrot.slane %v649, %v665
      %v667 = vlaneseq
      %v668 = vshrl.u32 %v667, 7
      %v669 = vsub.s32 0, %v668
      %v670 = vrot.slane %v650, %v669
      %v671 = vmul.f32 %v659, %v666
      %v672 = vmul.f32 %v660, %v666
      %v673 = vmul.f32 %v661, %v670
      %v674 = vmul.f32 %v662, %v670
      %v675 = vmax.f32 %v671, 0.0
      %v676 = vmax.f32 %v672, 0.0
      %v677 = vmax.f32 %v673, 0.0
      %v678 = vmax.f32 %v674, 0.0
      %v679 = vrot.slane %v675, 7
      %v680 = vrot.slane %v676, 7
      %v681 = vrot.slane %v677, 7
      %v682 = vrot.slane %v678, 7
      %v683 = vsel %vm248, %v681, %v682
      %v684 = vsel %vm248, %v680, %v681
      %v685 = vsel %vm248, %v679, %v680
      %v686 = vsel %vm248, %v682, %v679
      %v687 = vrot.slane %v675, 1
      %v688 = vrot.slane %v676, 1
      %v689 = vrot.slane %v677, 1
      %v690 = vrot.slane %v678, 1
      %v691 = vsel %vm257, %v689, %v690
      %v692 = vsel %vm257, %v688, %v689
      %v693 = vsel %vm257, %v687, %v688
      %v694 = vsel %vm257, %v690, %v687
      %v695 = vsel %vm266, %v693, %v686
      %v696 = vsel %vm267, %v692, %v685
      %v697 = vsel %vm268, %v691, %v684
      %v698 = vsel %vm269, %v694, %v683
      %v699 = vsel %vm278, %v686, %v693
      %v700 = vsel %vm279, %v685, %v692
      %v701 = vsel %vm280, %v684, %v691
      %v702 = vsel %vm281, %v683, %v694
      %v703 = vld [vmem:[%s2] sm:$0xff]
      %v704 = vld [vmem:[%s2 + $0x8] sm:$0xff]
      %v705 = vld [vmem:[%s2 + $0x10] sm:$0xff]
      %v706 = vld [vmem:[%s2 + $0x18] sm:$0xff]
      %v707 = vld [vmem:[%s2 + $0x20] sm:$0xff]
      %v708 = vld [vmem:[%s2 + $0x28] sm:$0xff]
      %v709 = vld [vmem:[%s2 + $0x30] sm:$0xff]
      %v710 = vld [vmem:[%s2 + $0x38] sm:$0xff]
      %v711 = vld [vmem:[%s2 + $0x40] sm:$0xff]
      %v712 = vld [vmem:[%s2 + $0x48] sm:$0xff]
      %v713 = vld [vmem:[%s2 + $0x50] sm:$0xff]
      %v714 = vld [vmem:[%s2 + $0x58] sm:$0xff]
      %v715 = vld [vmem:[%s2 + $0x60] sm:$0xff]
      %v716 = vld [vmem:[%s2 + $0x68] sm:$0xff]
      %v717 = vld [vmem:[%s2 + $0x70] sm:$0xff]
      %v718 = vld [vmem:[%s2 + $0x78] sm:$0xff]
      %v719 = vld [vmem:[%s2 + $0x80] sm:$0xff]
      %v720 = vld [vmem:[%s2 + $0x88] sm:$0xff]
      %v721 = vld [vmem:[%s2 + $0x90] sm:$0xff]
      %v722 = vld [vmem:[%s2 + $0x98] sm:$0xff]
      %v723 = vld [vmem:[%s2 + $0xa0] sm:$0xff]
      %v724 = vld [vmem:[%s2 + $0xa8] sm:$0xff]
      %v725 = vld [vmem:[%s2 + $0xb0] sm:$0xff]
      %v726 = vld [vmem:[%s2 + $0xb8] sm:$0xff]
      %v727 = vld [vmem:[%s2 + $0xc0] sm:$0xff]
      %v728 = vld [vmem:[%s2 + $0xc8] sm:$0xff]
      %v729 = vld [vmem:[%s2 + $0xd0] sm:$0xff]
      %v730 = vld [vmem:[%s2 + $0xd8] sm:$0xff]
      %v731 = vld [vmem:[%s2 + $0xe0] sm:$0xff]
      %v732 = vld [vmem:[%s2 + $0xe8] sm:$0xff]
      %v733 = vld [vmem:[%s2 + $0xf0] sm:$0xff]
      %v734 = vld [vmem:[%s2 + $0xf8] sm:$0xff]
      %v735 = vld [vmem:[%s2 + $0x100] sm:$0xff]
      %v736 = vld [vmem:[%s2 + $0x108] sm:$0xff]
      %v737 = vld [vmem:[%s2 + $0x110] sm:$0xff]
      %v738 = vld [vmem:[%s2 + $0x118] sm:$0xff]
      %v739 = vld [vmem:[%s2 + $0x120] sm:$0xff]
      %v740 = vld [vmem:[%s2 + $0x128] sm:$0xff]
      %v741 = vld [vmem:[%s2 + $0x130] sm:$0xff]
      %v742 = vld [vmem:[%s2 + $0x138] sm:$0xff]
      %v743 = vld [vmem:[%s2 + $0x140] sm:$0xff]
      %v744 = vld [vmem:[%s2 + $0x148] sm:$0xff]
      %v745 = vld [vmem:[%s2 + $0x150] sm:$0xff]
      %v746 = vld [vmem:[%s2 + $0x158] sm:$0xff]
      %v747 = vld [vmem:[%s2 + $0x160] sm:$0xff]
      %v748 = vld [vmem:[%s2 + $0x168] sm:$0xff]
      %v749 = vld [vmem:[%s2 + $0x170] sm:$0xff]
      %v750 = vld [vmem:[%s2 + $0x178] sm:$0xff]
      %751 = vmatprep.subr.mxu0 0.0
      %752 = vmatpush1.msra.mxu0 %v703
      %753 = vmatprep.subr.mxu0 0.0
      %754 = vmatpush1.msra.mxu0 %v704
      %755 = vmatprep.subr.mxu0 0.0
      %756 = vmatpush1.msra.mxu0 %v705
      %757 = vmatprep.subr.mxu0 0.0
      %758 = vmatpush1.msra.mxu0 %v706
      %759 = vmatprep.subr.mxu0 0.0
      %760 = vmatpush1.msra.mxu0 %v707
      %761 = vmatprep.subr.mxu0 0.0
      %762 = vmatpush1.msra.mxu0 %v708
      %763 = vmatprep.subr.mxu0 0.0
      %764 = vmatpush1.msra.mxu0 %v709
      %765 = vmatprep.subr.mxu0 0.0
      %766 = vmatpush1.msra.mxu0 %v710
      %767 = vmatprep.subr.mxu0 0.0
      %768 = vmatpush1.msra.mxu0 %v711
      %769 = vmatprep.subr.mxu0 0.0
      %770 = vmatpush1.msra.mxu0 %v712
      %771 = vmatprep.subr.mxu0 0.0
      %772 = vmatpush1.msra.mxu0 %v713
      %773 = vmatprep.subr.mxu0 0.0
      %774 = vmatpush1.msra.mxu0 %v714
      %775 = vmatprep.subr.mxu0 0.0
      %776 = vmatpush1.msra.mxu0 %v715
      %777 = vmatprep.subr.mxu0 0.0
      %778 = vmatpush1.msra.mxu0 %v716
      %779 = vmatprep.subr.mxu0 0.0
      %780 = vmatpush1.msra.mxu0 %v717
      %781 = vmatprep.subr.mxu0 0.0
      %782 = vmatpush1.msra.mxu0 %v718
      %783 = vmatprep.subr.mxu0 0.0
      %784 = vmatpush1.msra.mxu0 %v719
      %785 = vmatprep.subr.mxu0 0.0
      %786 = vmatpush1.msra.mxu0 %v720
      %787 = vmatprep.subr.mxu0 0.0
      %788 = vmatpush1.msra.mxu0 %v721
      %789 = vmatprep.subr.mxu0 0.0
      %790 = vmatpush1.msra.mxu0 %v722
      %791 = vmatprep.subr.mxu0 0.0
      %792 = vmatpush1.msra.mxu0 %v723
      %793 = vmatprep.subr.mxu0 0.0
      %794 = vmatpush1.msra.mxu0 %v724
      %795 = vmatprep.subr.mxu0 0.0
      %796 = vmatpush1.msra.mxu0 %v725
      %797 = vmatprep.subr.mxu0 0.0
      %798 = vmatpush1.msra.mxu0 %v726
      %799 = vmatprep.subr.mxu0 0.0
      %800 = vmatpush1.msra.mxu0 %v727
      %801 = vmatprep.subr.mxu0 0.0
      %802 = vmatpush1.msra.mxu0 %v728
      %803 = vmatprep.subr.mxu0 0.0
      %804 = vmatpush1.msra.mxu0 %v729
      %805 = vmatprep.subr.mxu0 0.0
      %806 = vmatpush1.msra.mxu0 %v730
      %807 = vmatprep.subr.mxu0 0.0
      %808 = vmatpush1.msra.mxu0 %v731
      %809 = vmatprep.subr.mxu0 0.0
      %810 = vmatpush1.msra.mxu0 %v732
      %811 = vmatprep.subr.mxu0 0.0
      %812 = vmatpush1.msra.mxu0 %v733
      %813 = vmatprep.subr.mxu0 0.0
      %814 = vmatpush1.msra.mxu0 %v734
      %815 = vmatprep.mubr.f32.mxu0 %v675
      %816 = vmatmul.mubr.f32.gmra.mrb[0].mxu0 %v695
      %v817 = vpop.f32.mrb[0].mxu0
      %v818 = vadd.f32 0.0, %v817
      %v819 = vpop.f32.mrb[0].mxu0
      %820 = vmatprep.mubr.f32.mxu0 %v676
      %821 = vmatmul.mubr.f32.gmra.mrb[0].mxu0 %v696
      %v822 = vpop.f32.mrb[0].mxu0
      %v823 = vadd.f32 0.0, %v822
      %v824 = vpop.f32.mrb[0].mxu0
      %825 = vmatprep.mubr.f32.mxu0 %v677
      %826 = vmatmul.mubr.f32.gmra.mrb[0].mxu0 %v697
      %v827 = vpop.f32.mrb[0].mxu0
      %v828 = vadd.f32 0.0, %v827
      %v829 = vpop.f32.mrb[0].mxu0
      %830 = vmatprep.mubr.f32.mxu0 %v678
      %831 = vmatmul.mubr.f32.gmra.mrb[0].mxu0 %v698
      %v832 = vpop.f32.mrb[0].mxu0
      %v833 = vadd.f32 0.0, %v832
      %v834 = vpop.f32.mrb[0].mxu0
      %835 = vdwg.mxu0
      %836 = vmatprep.subr.mxu0 0.0
      %837 = vmatpush1.msra.mxu0 %v735
      %838 = vmatprep.subr.mxu0 0.0
      %839 = vmatpush1.msra.mxu0 %v736
      %840 = vmatprep.subr.mxu0 0.0
      %841 = vmatpush1.msra.mxu0 %v737
      %842 = vmatprep.subr.mxu0 0.0
      %843 = vmatpush1.msra.mxu0 %v738
      %844 = vmatprep.subr.mxu0 0.0
      %845 = vmatpush1.msra.mxu0 %v739
      %846 = vmatprep.subr.mxu0 0.0
      %847 = vmatpush1.msra.mxu0 %v740
      %848 = vmatprep.subr.mxu0 0.0
      %849 = vmatpush1.msra.mxu0 %v741
      %850 = vmatprep.subr.mxu0 0.0
      %851 = vmatpush1.msra.mxu0 %v742
      %852 = vmatprep.subr.mxu0 0.0
      %853 = vmatpush1.msra.mxu0 %v743
      %854 = vmatprep.subr.mxu0 0.0
      %855 = vmatpush1.msra.mxu0 %v744
      %856 = vmatprep.subr.mxu0 0.0
      %857 = vmatpush1.msra.mxu0 %v745
      %858 = vmatprep.subr.mxu0 0.0
      %859 = vmatpush1.msra.mxu0 %v746
      %860 = vmatprep.subr.mxu0 0.0
      %861 = vmatpush1.msra.mxu0 %v747
      %862 = vmatprep.subr.mxu0 0.0
      %863 = vmatpush1.msra.mxu0 %v748
      %864 = vmatprep.subr.mxu0 0.0
      %865 = vmatpush1.msra.mxu0 %v749
      %866 = vmatprep.subr.mxu0 0.0
      %867 = vmatpush1.msra.mxu0 %v750
      %868 = vmatprep.subr.mxu0 0.0
      %869 = vmatpush1.msra.mxu0 0.0
      %870 = vmatprep.subr.mxu0 0.0
      %871 = vmatpush1.msra.mxu0 0.0
      %872 = vmatprep.subr.mxu0 0.0
      %873 = vmatpush1.msra.mxu0 0.0
      %874 = vmatprep.subr.mxu0 0.0
      %875 = vmatpush1.msra.mxu0 0.0
      %876 = vmatprep.subr.mxu0 0.0
      %877 = vmatpush1.msra.mxu0 0.0
      %878 = vmatprep.subr.mxu0 0.0
      %879 = vmatpush1.msra.mxu0 0.0
      %880 = vmatprep.subr.mxu0 0.0
      %881 = vmatpush1.msra.mxu0 0.0
      %882 = vmatprep.subr.mxu0 0.0
      %883 = vmatpush1.msra.mxu0 0.0
      %884 = vmatprep.subr.mxu0 0.0
      %885 = vmatpush1.msra.mxu0 0.0
      %886 = vmatprep.subr.mxu0 0.0
      %887 = vmatpush1.msra.mxu0 0.0
      %888 = vmatprep.subr.mxu0 0.0
      %889 = vmatpush1.msra.mxu0 0.0
      %890 = vmatprep.subr.mxu0 0.0
      %891 = vmatpush1.msra.mxu0 0.0
      %892 = vmatprep.subr.mxu0 0.0
      %893 = vmatpush1.msra.mxu0 0.0
      %894 = vmatprep.subr.mxu0 0.0
      %895 = vmatpush1.msra.mxu0 0.0
      %896 = vmatprep.subr.mxu0 0.0
      %897 = vmatpush1.msra.mxu0 0.0
      %898 = vmatprep.subr.mxu0 0.0
      %899 = vmatpush1.msra.mxu0 0.0
      %900 = vmatprep.mubr.f32.mxu0 0.0
      %901 = vmatmul.mubr.f32.gmra.mrb[0].mxu0 %v699
      %v902 = vpop.f32.mrb[0].mxu0
      %v903 = vadd.f32 %v818, %v902
      %v904 = vpop.f32.mrb[0].mxu0
      %905 = vmatprep.mubr.f32.mxu0 0.0
      %906 = vmatmul.mubr.f32.gmra.mrb[0].mxu0 %v700
      %v907 = vpop.f32.mrb[0].mxu0
      %v908 = vadd.f32 %v823, %v907
      %v909 = vpop.f32.mrb[0].mxu0
      %910 = vmatprep.mubr.f32.mxu0 0.0
      %911 = vmatmul.mubr.f32.gmra.mrb[0].mxu0 %v701
      %v912 = vpop.f32.mrb[0].mxu0
      %v913 = vadd.f32 %v828, %v912
      %v914 = vpop.f32.mrb[0].mxu0
      %915 = vmatprep.mubr.f32.mxu0 0.0
      %916 = vmatmul.mubr.f32.gmra.mrb[0].mxu0 %v702
      %v917 = vpop.f32.mrb[0].mxu0
      %v918 = vadd.f32 %v833, %v917
      %v919 = vpop.f32.mrb[0].mxu0
      %920 = vdwg.mxu0
      %v921 = vadd.f32 %v903, %v908
      %v922 = vrot.slane %v921, 4
      %v923 = vadd.f32 %v921, %v922
      %v924 = vrot.slane %v923, 2
      %v925 = vadd.f32 %v923, %v924
      %v926 = vrot.slane %v925, 1
      %v927 = vadd.f32 %v925, %v926
      %v928 = vadd.f32 %v913, %v918
      %v929 = vrot.slane %v928, 4
      %v930 = vadd.f32 %v928, %v929
      %v931 = vrot.slane %v930, 2
      %v932 = vadd.f32 %v930, %v931
      %v933 = vrot.slane %v932, 1
      %v934 = vadd.f32 %v932, %v933
      %v935 = vmul.f32 %v903, %v903
      %v936 = vmul.f32 %v908, %v908
      %v937 = vmul.f32 %v913, %v913
      %v938 = vmul.f32 %v918, %v918
      %v939 = vadd.f32 %v935, %v936
      %v940 = vrot.slane %v939, 4
      %v941 = vadd.f32 %v939, %v940
      %v942 = vrot.slane %v941, 2
      %v943 = vadd.f32 %v941, %v942
      %v944 = vrot.slane %v943, 1
      %v945 = vadd.f32 %v943, %v944
      %v946 = vadd.f32 %v937, %v938
      %v947 = vrot.slane %v946, 4
      %v948 = vadd.f32 %v946, %v947
      %v949 = vrot.slane %v948, 2
      %v950 = vadd.f32 %v948, %v949
      %v951 = vrot.slane %v950, 1
      %v952 = vadd.f32 %v950, %v951
      %v955 = vsel %vm538, %v934, %v927
      %957 = vrot.lane.b32.xlu0 %v955, 8
      %v958 = vpop.permute.xlu0 %957
      %v960 = vrot.slane %v958, 1
      %v963 = vadd.f32 %v927, %v958
      %v964 = vadd.f32 %v934, %v960
      %v967 = vsel %vm538, %v952, %v945
      %969 = vrot.lane.b32.xlu0 %v967, 8
      %v970 = vpop.permute.xlu0 %969
      %v972 = vrot.slane %v970, 1
      %v975 = vadd.f32 %v945, %v970
      %v976 = vadd.f32 %v952, %v972
      %v979 = vrot.slane %v964, 7
      %v980 = vsel %vm538, %v979, %v963
      %982 = vrot.lane.b32.xlu0 %v980, 16
      %v983 = vpop.permute.xlu0 %982
      %v985 = vrot.slane %v983, 1
      %v988 = vadd.f32 %v963, %v983
      %v989 = vadd.f32 %v964, %v985
      %v992 = vrot.slane %v976, 7
      %v993 = vsel %vm538, %v992, %v975
      %995 = vrot.lane.b32.xlu0 %v993, 16
      %v996 = vpop.permute.xlu0 %995
      %v998 = vrot.slane %v996, 1
      %v1001 = vadd.f32 %v975, %v996
      %v1002 = vadd.f32 %v976, %v998
      %v1005 = vrot.slane %v989, 7
      %v1006 = vsel %vm538, %v1005, %v988
      %1008 = vrot.lane.b32.xlu0 %v1006, 32
      %v1009 = vpop.permute.xlu0 %1008
      %v1011 = vrot.slane %v1009, 1
      %v1014 = vadd.f32 %v988, %v1009
      %v1015 = vadd.f32 %v989, %v1011
      %v1018 = vrot.slane %v1002, 7
      %v1019 = vsel %vm538, %v1018, %v1001
      %1021 = vrot.lane.b32.xlu0 %v1019, 32
      %v1022 = vpop.permute.xlu0 %1021
      %v1024 = vrot.slane %v1022, 1
      %v1027 = vadd.f32 %v1001, %v1022
      %v1028 = vadd.f32 %v1002, %v1024
      %v1031 = vrot.slane %v1015, 7
      %v1032 = vsel %vm538, %v1031, %v1014
      %1034 = vrot.lane.b32.xlu0 %v1032, 64
      %v1035 = vpop.permute.xlu0 %1034
      %v1037 = vrot.slane %v1035, 1
      %v1040 = vadd.f32 %v1014, %v1035
      %v1041 = vadd.f32 %v1015, %v1037
      %v1044 = vrot.slane %v1028, 7
      %v1045 = vsel %vm538, %v1044, %v1027
      %1047 = vrot.lane.b32.xlu0 %v1045, 64
      %v1048 = vpop.permute.xlu0 %1047
      %v1050 = vrot.slane %v1048, 1
      %v1053 = vadd.f32 %v1027, %v1048
      %v1054 = vadd.f32 %v1028, %v1050
      %v1055 = vmul.f32 %v1040, 0.00390625
      %v1056 = vmul.f32 %v1041, 0.00390625
      %v1057 = vmul.f32 %v1053, 0.00390625
      %v1058 = vmul.f32 %v1054, 0.00390625
      %v1059 = vmul.f32 %v1055, %v1055
      %v1060 = vmul.f32 %v1056, %v1056
      %v1061 = vsub.f32 %v1057, %v1059
      %v1062 = vsub.f32 %v1058, %v1060
      %v1063 = vadd.f32 %v1061, 1e-05
      %v1064 = vadd.f32 %v1062, 1e-05
      %v1065 = vrsqrt.pop %v1063
      %v1066 = vrsqrt.pop %v1064
      %v1067 = vlaneseq
      %v1068 = vshrl.u32 %v1067, 7
      %v1069 = vsub.s32 0, %v1068
      %v1070 = vrot.slane %v1055, %v1069
      %v1071 = vlaneseq
      %v1072 = vshrl.u32 %v1071, 7
      %v1073 = vsub.s32 0, %v1072
      %v1074 = vrot.slane %v1056, %v1073
      %v1075 = vsub.f32 %v903, %v1070
      %v1076 = vsub.f32 %v908, %v1070
      %v1077 = vsub.f32 %v913, %v1074
      %v1078 = vsub.f32 %v918, %v1074
      %v1079 = vlaneseq
      %v1080 = vshrl.u32 %v1079, 7
      %v1081 = vsub.s32 0, %v1080
      %v1082 = vrot.slane %v1065, %v1081
      %v1083 = vlaneseq
      %v1084 = vshrl.u32 %v1083, 7
      %v1085 = vsub.s32 0, %v1084
      %v1086 = vrot.slane %v1066, %v1085
      %v1087 = vmul.f32 %v1075, %v1082
      %v1088 = vmul.f32 %v1076, %v1082
      %v1089 = vmul.f32 %v1077, %v1086
      %v1090 = vmul.f32 %v1078, %v1086
      %v1091 = vadd.f32 %v179, %v1087
      %v1092 = vadd.f32 %v180, %v1088
      %v1093 = vadd.f32 %v181, %v1089
      %v1094 = vadd.f32 %v182, %v1090
      %1095 = vst [vmem:[%s177] sm:$0xff] %v1091
      %1096 = vst [vmem:[%s177 + $0x8] sm:$0xff] %v1092
      %1097 = vst [vmem:[%s177 + $0x10] sm:$0xff] %v1093
      %1098 = vst [vmem:[%s177 + $0x18] sm:$0xff] %v1094
      %s1099 = smul.u32 2, %s14
      %p1100 = scmp.lt.s32.totalorder %s1099, 3
      %s1101 = scalar_select %p1100, %s1099, 3
      %s1102 = smul.addr %s1101, 2
      %s1103 = smul.addr %s1102, 8
      %s1104 = scalar_lea.vmem %s3, %s1103
      // Predicated region
      $region33: #{resnet_block.1} parent=31 // pred_check
        %p1105 = pneg %p100
      $region34: #{resnet_block.1} parent=31 // pred_check_branch
        %1107 = sbr.rel (%p1105) target = $region36
      $region35: #{resnet_block.1} parent=31 // pred_region
        %s1108 = smul.u32 2, %s14
      $region36: #{resnet_block.1} parent=31 // pred_fallthru
        _
    $region32: #{resnet_block.1} parent=5 // pred_fallthru
      _
    %p1109 = scmp.le.s32.totalorder 2, %s9
    // Predicated region
    $region37: #{resnet_block.1} parent=5 // pred_check
      %p1110 = pneg %p1109
    $region38: #{resnet_block.1} parent=5 // pred_check_branch
      %1112 = sbr.rel (%p1110) target = $region40
    $region39: #{resnet_block.1} parent=5 // pred_region
      %s1113 = ssub.s32 %s9, 2
      // Predicated region
      $region41: #{resnet_block.1} parent=39 // pred_check
        %p1114 = pneg %p106
      $region42: #{resnet_block.1} parent=39 // pred_check_branch
        %1116 = sbr.rel (%p1114) target = $region44
      $region43: #{resnet_block.1} parent=39 // pred_region
        %s1117 = smul.u32 2, %s15
        %p1118 = scmp.lt.s32.totalorder %s1117, 3
        %s1119 = scalar_select %p1118, %s1117, 3
        %s1120 = smul.addr %s1119, 2
        %s1121 = smul.addr %s1120, 8
        %s1122 = scalar_lea.vmem %s3, %s1121
      $region44: #{resnet_block.1} parent=39 // pred_fallthru
        _
    $region40: #{resnet_block.1} parent=5 // pred_fallthru
      _
  $region6: #{resnet_block.1} parent=0 // loop_footer
    %s13 = sadd.s32 1, %s9
  $region7: #{resnet_block.1} parent=0 // loop_footer_branch
    %8 = sbr.rel target = $region3
  $region8: #{resnet_block.1} parent=0 // loop_exit
    _

</llo_original>
